<compile_context>
chip_gen: v6e
topology: v6e:2x2x1
jax: 0.10.0
libtpu: 0.0.40
codegen_flags: <defaults>
</compile_context>

<pallas_src>
import functools

import jax
import jax.numpy as jnp
import numpy as np
from jax.experimental import pallas as pl
from jax.experimental.pallas import tpu as pltpu

_VMEM_LIMIT_BYTES = 64 * 1024 * 1024


# --------------------------------------------------------------------------------------
# helpers
# --------------------------------------------------------------------------------------
def _round_up(n, m):
    return ((n + m - 1) // m) * m


def _pad2d(a, rows, cols):
    out = jnp.zeros((rows, cols), a.dtype)
    return out.at[: a.shape[0], : a.shape[1]].set(a)


def _pad_bias(b, cols):
    out = jnp.zeros((1, cols), jnp.float32)
    return out.at[0, : b.shape[0]].set(b.astype(jnp.float32))


def fold_bn_into_linear(w, b, gamma, beta, mean, var, eps=1e-5):
    """Fold eval-mode BatchNorm1d into the preceding Linear (y = x@W + b)."""
    scale = gamma / jnp.sqrt(var + eps)
    w_f = w * scale[None, :]
    b_f = (b - mean) * scale + beta
    return w_f, b_f


def _pick_tm(n_pad):
    """Row-block: 256 when it still leaves >=2 'parallel' blocks (v7x megacore), else 128."""
    for tm in (256, 128):
        if n_pad % tm == 0 and n_pad // tm >= 2:
            return tm
    return min(n_pad, 128)


def _pick_tk(n_pad):
    """Reduction block: whole row-panel for moderate graphs (single fat step), else tiles."""
    if n_pad <= 2048:
        return n_pad
    for tk in (512, 256, 128):
        if n_pad % tk == 0:
            return tk
    return 128


# --------------------------------------------------------------------------------------
# fused GIN layer kernel:  relu( relu( (A@x + x) @ W1' + b1' ) @ W2 + b2 )
# --------------------------------------------------------------------------------------
def _gin_layer_kernel(a_ref, x_ref, w1_ref, b1_ref, w2_ref, b2_ref, o_ref,
                      acc_ref, *, tm, tk):
    i = pl.program_id(0)
    k = pl.program_id(1)
    row0 = pl.multiple_of(i * tm, tm)
    col0 = pl.multiple_of(k * tk, tk)

    @pl.when(k == 0)
    def _():
        # GIN self term (eps = 0): seed the accumulator with x_i (no A+I materialization,
        # and the add stays off the heavy final step).
        acc_ref[...] = x_ref[pl.ds(row0, tm), :].astype(jnp.float32)

    # Neighbor aggregation tile: acc += A[i-block, k-block] @ x[k-block]
    # (x is fully VMEM-resident; bf16 MXU, f32 accumulate).
    acc_ref[...] += jnp.dot(a_ref[...], x_ref[pl.ds(col0, tk), :],
                            preferred_element_type=jnp.float32)

    @pl.when(k == pl.num_programs(1) - 1)
    def _():
        # Linear-1 (eval-BN folded into w1/b1) + ReLU.
        h = jnp.dot(acc_ref[...].astype(jnp.bfloat16), w1_ref[...],
                    preferred_element_type=jnp.float32)
        h = jnp.maximum(h + b1_ref[...], 0.0)
        # Linear-2 (plain last MLP layer) followed by conv(...).relu().
        h = jnp.dot(h.astype(jnp.bfloat16), w2_ref[...],
                    preferred_element_type=jnp.float32)
        h = jnp.maximum(h + b2_ref[...], 0.0)
        o_ref[...] = h.astype(o_ref.dtype)


def gin_layer(a, x, w1, b1, w2, b2, *, block_rows=None, block_k=None):
    """One fused GINConv + MLP + relu layer. a, x, weights must be padded (128-aligned)."""
    n_pad = a.shape[0]
    c_in = x.shape[1]
    c_out = w1.shape[1]
    tm = block_rows if block_rows is not None else _pick_tm(n_pad)
    tk = block_k if block_k is not None else _pick_tk(n_pad)
    assert n_pad % tm == 0 and n_pad % tk == 0

    kernel = functools.partial(_gin_layer_kernel, tm=tm, tk=tk)
    return pl.pallas_call(
        kernel,
        out_shape=jax.ShapeDtypeStruct((n_pad, c_out), jnp.bfloat16),
        grid_spec=pltpu.PrefetchScalarGridSpec(
            num_scalar_prefetch=0,
            grid=(n_pad // tm, n_pad // tk),
            in_specs=[
                pl.BlockSpec((tm, tk), lambda i, k: (i, k)),        # A tile (streamed)
                pl.BlockSpec((n_pad, c_in), lambda i, k: (0, 0)),   # x (fully VMEM-resident)
                pl.BlockSpec((c_in, c_out), lambda i, k: (0, 0)),   # W1' (VMEM-resident)
                pl.BlockSpec((1, c_out), lambda i, k: (0, 0)),      # b1'
                pl.BlockSpec((c_out, c_out), lambda i, k: (0, 0)),  # W2  (VMEM-resident)
                pl.BlockSpec((1, c_out), lambda i, k: (0, 0)),      # b2
            ],
            out_specs=pl.BlockSpec((tm, c_out), lambda i, k: (i, 0)),
            scratch_shapes=[pltpu.VMEM((tm, c_in), jnp.float32)],
        ),
        compiler_params=pltpu.CompilerParams(
            dimension_semantics=("parallel", "arbitrary"),
            vmem_limit_bytes=_VMEM_LIMIT_BYTES),
    )(a, x, w1, b1, w2, b2)


# --------------------------------------------------------------------------------------
# fused global_add_pool + final MLP kernel:  relu( (P@x) @ M1 + m1 ) @ M2 + m2
# --------------------------------------------------------------------------------------
def _pool_mlp_kernel(p_ref, x_ref, w1_ref, b1_ref, w2_ref, b2_ref, o_ref, acc_ref):
    k = pl.program_id(0)

    @pl.when(k == 0)
    def _():
        acc_ref[...] = jnp.zeros_like(acc_ref)

    acc_ref[...] += jnp.dot(p_ref[...], x_ref[...],
                            preferred_element_type=jnp.float32)

    @pl.when(k == pl.num_programs(0) - 1)
    def _():
        h = jnp.dot(acc_ref[...].astype(jnp.bfloat16), w1_ref[...],
                    preferred_element_type=jnp.float32)
        h = jnp.maximum(h + b1_ref[...], 0.0)
        h = jnp.dot(h.astype(jnp.bfloat16), w2_ref[...],
                    preferred_element_type=jnp.float32)
        o_ref[...] = (h + b2_ref[...]).astype(o_ref.dtype)


def pool_and_mlp(p, x, w1, b1, w2, b2, *, block_k=None):
    b_pad, n_pad = p.shape
    c_in = x.shape[1]
    c_hid = w1.shape[1]
    c_out = w2.shape[1]
    tk = block_k if block_k is not None else _pick_tk(n_pad)
    assert n_pad % tk == 0

    return pl.pallas_call(
        _pool_mlp_kernel,
        out_shape=jax.ShapeDtypeStruct((b_pad, c_out), jnp.float32),
        grid_spec=pltpu.PrefetchScalarGridSpec(
            num_scalar_prefetch=0,
            grid=(n_pad // tk,),
            in_specs=[
                pl.BlockSpec((b_pad, tk), lambda k: (0, k)),    # pooling matrix tile
                pl.BlockSpec((tk, c_in), lambda k: (k, 0)),     # node features
                pl.BlockSpec((c_in, c_hid), lambda k: (0, 0)),  # M1 (VMEM-resident)
                pl.BlockSpec((1, c_hid), lambda k: (0, 0)),     # m1
                pl.BlockSpec((c_hid, c_out), lambda k: (0, 0)), # M2 (VMEM-resident)
                pl.BlockSpec((1, c_out), lambda k: (0, 0)),     # m2
            ],
            out_specs=pl.BlockSpec((b_pad, c_out), lambda k: (0, 0)),
            scratch_shapes=[pltpu.VMEM((b_pad, c_in), jnp.float32)],
        ),
        compiler_params=pltpu.CompilerParams(
            dimension_semantics=("arbitrary",),
            vmem_limit_bytes=_VMEM_LIMIT_BYTES),
    )(p, x, w1, b1, w2, b2)


# --------------------------------------------------------------------------------------
# parameter construction / padding
# --------------------------------------------------------------------------------------
def make_raw_params(key, in_channels, hidden, out_channels, num_layers):
    convs = []
    c_prev = in_channels
    keys = jax.random.split(key, num_layers + 1)
    for l in range(num_layers):
        ks = jax.random.split(keys[l], 8)
        convs.append({
            "w1": jax.random.normal(ks[0], (c_prev, hidden), jnp.float32) / np.sqrt(c_prev),
            "b1": 0.1 * jax.random.normal(ks[1], (hidden,), jnp.float32),
            "gamma": 1.0 + 0.1 * jax.random.normal(ks[2], (hidden,), jnp.float32),
            "beta": 0.1 * jax.random.normal(ks[3], (hidden,), jnp.float32),
            "mean": 0.1 * jax.random.normal(ks[4], (hidden,), jnp.float32),
            "var": jax.random.uniform(ks[5], (hidden,), jnp.float32, 0.5, 1.5),
            "w2": jax.random.normal(ks[6], (hidden, hidden), jnp.float32) / np.sqrt(hidden),
            "b2": 0.1 * jax.random.normal(ks[7], (hidden,), jnp.float32),
        })
        c_prev = hidden
    km = jax.random.split(keys[-1], 4)
    mlp = {
        "w1": jax.random.normal(km[0], (hidden, hidden), jnp.float32) / np.sqrt(hidden),
        "b1": 0.1 * jax.random.normal(km[1], (hidden,), jnp.float32),
        "w2": jax.random.normal(km[2], (hidden, out_channels), jnp.float32) / np.sqrt(hidden),
        "b2": 0.1 * jax.random.normal(km[3], (out_channels,), jnp.float32),
    }
    return {"convs": convs, "mlp": mlp}


def prepare_params(raw, in_channels, hidden, out_channels):
    """Fold eval-BN into linear-1 and pad everything to 128-lane-aligned bf16/f32."""
    c_in_pad = _round_up(in_channels, 128)
    hid_pad = _round_up(hidden, 128)
    out_pad = _round_up(out_channels, 128)
    conv_padded = []
    c_prev_pad = c_in_pad
    for layer in raw["convs"]:
        w1f, b1f = fold_bn_into_linear(layer["w1"], layer["b1"], layer["gamma"],
                                       layer["beta"], layer["mean"], layer["var"],
                                       eps=1e-5)
        conv_padded.append((
            _pad2d(w1f, c_prev_pad, hid_pad).astype(jnp.bfloat16),
            _pad_bias(b1f, hid_pad),
            _pad2d(layer["w2"], hid_pad, hid_pad).astype(jnp.bfloat16),
            _pad_bias(layer["b2"], hid_pad),
        ))
        c_prev_pad = hid_pad
    m = raw["mlp"]
    mlp_padded = (
        _pad2d(m["w1"], hid_pad, hid_pad).astype(jnp.bfloat16),
        _pad_bias(m["b1"], hid_pad),
        _pad2d(m["w2"], hid_pad, out_pad).astype(jnp.bfloat16),
        _pad_bias(m["b2"], out_pad),
    )
    return {"conv_padded": conv_padded, "mlp_padded": mlp_padded,
            "hidden_channels": hidden, "out_channels": out_channels}


def pad_inputs(x, adj, batch, batch_size):
    # NOTE: padded columns of A and of the pooling matrix MUST stay exactly zero; padded
    # node rows pick up relu(b1') after layer 1 but never leak into real outputs because
    # of that invariant.
    n, c_in = x.shape
    n_pad = _round_up(n, 128)
    c_in_pad = _round_up(c_in, 128)
    b_pad = _round_up(max(batch_size, 1), 16)   # 16: bf16 sublane packing
    x_p = _pad2d(x, n_pad, c_in_pad).astype(jnp.bfloat16)
    a_p = _pad2d(adj, n_pad, n_pad).astype(jnp.bfloat16)
    pool = (batch[None, :] == jnp.arange(b_pad)[:, None]).astype(jnp.float32)
    pool_p = _pad2d(pool, b_pad, n_pad).astype(jnp.bfloat16)
    return x_p, a_p, pool_p


# --------------------------------------------------------------------------------------
# full forward
# --------------------------------------------------------------------------------------
def gin_forward_pallas(x_p, a_p, pool_p, params, *, block_rows=None, block_k=None):
    x_cur = x_p
    for (w1, b1, w2, b2) in params["conv_padded"]:
        x_cur = gin_layer(a_p, x_cur, w1, b1, w2, b2,
                          block_rows=block_rows, block_k=block_k)
    mw1, mb1, mw2, mb2 = params["mlp_padded"]
    return pool_and_mlp(pool_p, x_cur, mw1, mb1, mw2, mb2, block_k=block_k)


def gin_reference(x_p, a_p, pool_p, params):
    """Pure-JAX reference with the same bf16/f32 numerics as the kernels."""
    xf = x_p
    for (w1, b1, w2, b2) in params["conv_padded"]:
        agg = jnp.dot(a_p, xf, preferred_element_type=jnp.float32) + xf.astype(jnp.float32)
        h = jnp.dot(agg.astype(jnp.bfloat16), w1, preferred_element_type=jnp.float32) + b1
        h = jnp.maximum(h, 0.0)
        h = jnp.dot(h.astype(jnp.bfloat16), w2, preferred_element_type=jnp.float32) + b2
        xf = jnp.maximum(h, 0.0).astype(jnp.bfloat16)
    g = jnp.dot(pool_p, xf, preferred_element_type=jnp.float32)
    mw1, mb1, mw2, mb2 = params["mlp_padded"]
    h = jnp.maximum(
        jnp.dot(g.astype(jnp.bfloat16), mw1, preferred_element_type=jnp.float32) + mb1, 0.0)
    return jnp.dot(h.astype(jnp.bfloat16), mw2, preferred_element_type=jnp.float32) + mb2


# --------------------------------------------------------------------------------------
# demo
# --------------------------------------------------------------------------------------
if __name__ == "__main__":
    key = jax.random.PRNGKey(0)
    num_nodes, in_channels = 150, 16
    hidden_channels, out_channels = 64, 8
    num_layers = 3
    batch_size = 4  # number of graphs

    k_x, k_adj, k_p = jax.random.split(key, 3)
    x = jax.random.normal(k_x, (num_nodes, in_channels), jnp.float32)
    adj = (jax.random.uniform(k_adj, (num_nodes, num_nodes)) < 0.08).astype(jnp.float32)
    adj = adj * (1.0 - jnp.eye(num_nodes, dtype=jnp.float32))  # no self loops (A[i,j]=1: edge j->i)
    batch = jnp.minimum((jnp.arange(num_nodes) * batch_size) // num_nodes,
                        batch_size - 1).astype(jnp.int32)

    raw = make_raw_params(k_p, in_channels, hidden_channels, out_channels, num_layers)
    params = prepare_params(raw, in_channels, hidden_channels, out_channels)
    x_p, a_p, pool_p = pad_inputs(x, adj, batch, batch_size)

    out_pad = gin_forward_pallas(x_p, a_p, pool_p, params)
    out = out_pad[:batch_size, :out_channels]
    jax.block_until_ready(out)

    ref = gin_reference(x_p, a_p, pool_p, params)[:batch_size, :out_channels]
    if not np.allclose(np.asarray(out, np.float32), np.asarray(ref, np.float32),
                       rtol=1e-2, atol=1e-2):
        raise SystemExit("Pallas GIN output mismatch vs reference")

    print("KERNEL_OK")
</pallas_src>

<mosaic_0001>
module attributes {stable_mosaic.version = 11 : i64} {
  func.func @_gin_layer_kernel(%arg0: i32, %arg1: i32, %arg2: memref<128x256xbf16, #tpu.memory_space<vmem>>, %arg3: memref<256x128xbf16, #tpu.memory_space<vmem>>, %arg4: memref<128x128xbf16, #tpu.memory_space<vmem>>, %arg5: memref<1x128xf32, #tpu.memory_space<vmem>>, %arg6: memref<128x128xbf16, #tpu.memory_space<vmem>>, %arg7: memref<1x128xf32, #tpu.memory_space<vmem>>, %arg8: memref<128x128xbf16, #tpu.memory_space<vmem>>, %arg9: memref<128x128xf32, #tpu.memory_space<vmem>>) attributes {dimension_semantics = [#tpu.dimension_semantics<parallel>, #tpu.dimension_semantics<arbitrary>], iteration_bounds = array<i64: 2, 1>, scalar_prefetch = 0 : i64, scratch_operands = 1 : i64, tpu.core_type = #tpu.core_type<tc>, window_params = [{transform_indices = @transform_0, window_bounds = array<i64: 128, 256>}, {pipeline_mode = #tpu.pipeline_mode<synchronous>, transform_indices = @transform_1, window_bounds = array<i64: 256, 128>}, {pipeline_mode = #tpu.pipeline_mode<synchronous>, transform_indices = @transform_2, window_bounds = array<i64: 128, 128>}, {pipeline_mode = #tpu.pipeline_mode<synchronous>, transform_indices = @transform_3, window_bounds = array<i64: 1, 128>}, {pipeline_mode = #tpu.pipeline_mode<synchronous>, transform_indices = @transform_4, window_bounds = array<i64: 128, 128>}, {pipeline_mode = #tpu.pipeline_mode<synchronous>, transform_indices = @transform_5, window_bounds = array<i64: 1, 128>}, {transform_indices = @transform_6, window_bounds = array<i64: 128, 128>}]} {
    %c128_i32 = arith.constant 128 : i32
    %0 = arith.muli %arg0, %c128_i32 : i32
    %1 = tpu.assume_multiple %0, 128 : i32
    %c256_i32 = arith.constant 256 : i32
    %2 = arith.muli %arg1, %c256_i32 : i32
    %3 = tpu.assume_multiple %2, 256 : i32
    %c0_i32 = arith.constant 0 : i32
    %4 = arith.cmpi eq, %arg1, %c0_i32 : i32
    %5 = arith.extui %4 : i1 to i32
    %c0_i32_0 = arith.constant 0 : i32
    %6 = arith.cmpi ne, %5, %c0_i32_0 : i32
    scf.if %6 {
      %17 = arith.index_cast %1 : i32 to index
      %c0_9 = arith.constant 0 : index
      %18 = vector.load %arg3[%17, %c0_9] : memref<256x128xbf16, #tpu.memory_space<vmem>>, vector<128x128xbf16>
      %19 = arith.extf %18 : vector<128x128xbf16> to vector<128x128xf32>
      %c0_10 = arith.constant 0 : index
      %c0_11 = arith.constant 0 : index
      %20 = vector.load %arg9[%c0_10, %c0_11] : memref<128x128xf32, #tpu.memory_space<vmem>>, vector<128x128xf32>
      tpu.vector_store %arg9[%c0_10, %c0_11], %19 {strides = array<i32>} : memref<128x128xf32, #tpu.memory_space<vmem>>, vector<128x128xf32>,
    } else {
    }
    %c0 = arith.constant 0 : index
    %c0_1 = arith.constant 0 : index
    %7 = vector.load %arg9[%c0, %c0_1] : memref<128x128xf32, #tpu.memory_space<vmem>>, vector<128x128xf32>
    %c0_2 = arith.constant 0 : index
    %c0_3 = arith.constant 0 : index
    %8 = vector.load %arg2[%c0_2, %c0_3] : memref<128x256xbf16, #tpu.memory_space<vmem>>, vector<128x256xbf16>
    %9 = arith.index_cast %3 : i32 to index
    %c0_4 = arith.constant 0 : index
    %10 = vector.load %arg3[%9, %c0_4] : memref<256x128xbf16, #tpu.memory_space<vmem>>, vector<256x128xbf16>
    %cst = arith.constant dense<0.000000e+00> : vector<128x128xf32>
    %11 = tpu.matmul %8, %10, %cst {dimension_numbers = #tpu.dot_dimension_numbers<[1], [0], [0], [1], [0, 0, 1, 1], [], []>} : vector<128x256xbf16>, vector<256x128xbf16>, vector<128x128xf32> -> vector<128x128xf32>
    %12 = arith.addf %7, %11 : vector<128x128xf32>
    %c0_5 = arith.constant 0 : index
    %c0_6 = arith.constant 0 : index
    %13 = vector.load %arg9[%c0_5, %c0_6] : memref<128x128xf32, #tpu.memory_space<vmem>>, vector<128x128xf32>
    tpu.vector_store %arg9[%c0_5, %c0_6], %12 {strides = array<i32>} : memref<128x128xf32, #tpu.memory_space<vmem>>, vector<128x128xf32>,
    %c0_i32_7 = arith.constant 0 : i32
    %14 = arith.cmpi eq, %arg1, %c0_i32_7 : i32
    %15 = arith.extui %14 : i1 to i32
    %c0_i32_8 = arith.constant 0 : i32
    %16 = arith.cmpi ne, %15, %c0_i32_8 : i32
    scf.if %16 {
      %c0_9 = arith.constant 0 : index
      %c0_10 = arith.constant 0 : index
      %17 = vector.load %arg9[%c0_9, %c0_10] : memref<128x128xf32, #tpu.memory_space<vmem>>, vector<128x128xf32>
      %18 = arith.truncf %17 : vector<128x128xf32> to vector<128x128xbf16>
      %c0_11 = arith.constant 0 : index
      %c0_12 = arith.constant 0 : index
      %19 = vector.load %arg4[%c0_11, %c0_12] : memref<128x128xbf16, #tpu.memory_space<vmem>>, vector<128x128xbf16>
      %cst_13 = arith.constant dense<0.000000e+00> : vector<128x128xf32>
      %20 = tpu.matmul %18, %19, %cst_13 {dimension_numbers = #tpu.dot_dimension_numbers<[1], [0], [0], [1], [0, 0, 1, 1], [], []>} : vector<128x128xbf16>, vector<128x128xbf16>, vector<128x128xf32> -> vector<128x128xf32>
      %c0_14 = arith.constant 0 : index
      %c0_15 = arith.constant 0 : index
      %21 = vector.load %arg5[%c0_14, %c0_15] : memref<1x128xf32, #tpu.memory_space<vmem>>, vector<1x128xf32>
      %22 = vector.broadcast %21 : vector<1x128xf32> to vector<128x128xf32>
      %23 = arith.addf %20, %22 : vector<128x128xf32>
      %cst_16 = arith.constant 0.000000e+00 : f32
      %24 = vector.broadcast %cst_16 : f32 to vector<128x128xf32>
      %25 = arith.maximumf %23, %24 : vector<128x128xf32>
      %26 = arith.truncf %25 : vector<128x128xf32> to vector<128x128xbf16>
      %c0_17 = arith.constant 0 : index
      %c0_18 = arith.constant 0 : index
      %27 = vector.load %arg6[%c0_17, %c0_18] : memref<128x128xbf16, #tpu.memory_space<vmem>>, vector<128x128xbf16>
      %cst_19 = arith.constant dense<0.000000e+00> : vector<128x128xf32>
      %28 = tpu.matmul %26, %27, %cst_19 {dimension_numbers = #tpu.dot_dimension_numbers<[1], [0], [0], [1], [0, 0, 1, 1], [], []>} : vector<128x128xbf16>, vector<128x128xbf16>, vector<128x128xf32> -> vector<128x128xf32>
      %c0_20 = arith.constant 0 : index
      %c0_21 = arith.constant 0 : index
      %29 = vector.load %arg7[%c0_20, %c0_21] : memref<1x128xf32, #tpu.memory_space<vmem>>, vector<1x128xf32>
      %30 = vector.broadcast %29 : vector<1x128xf32> to vector<128x128xf32>
      %31 = arith.addf %28, %30 : vector<128x128xf32>
      %cst_22 = arith.constant 0.000000e+00 : f32
      %32 = vector.broadcast %cst_22 : f32 to vector<128x128xf32>
      %33 = arith.maximumf %31, %32 : vector<128x128xf32>
      %34 = arith.truncf %33 : vector<128x128xf32> to vector<128x128xbf16>
      %c0_23 = arith.constant 0 : index
      %c0_24 = arith.constant 0 : index
      %35 = vector.load %arg8[%c0_23, %c0_24] : memref<128x128xbf16, #tpu.memory_space<vmem>>, vector<128x128xbf16>
      tpu.vector_store %arg8[%c0_23, %c0_24], %34 {strides = array<i32>} : memref<128x128xbf16, #tpu.memory_space<vmem>>, vector<128x128xbf16>,
    } else {
    }
    return
  }
  func.func @transform_0(%arg0: i32, %arg1: i32) -> (i32, i32) {
    %c0_i32 = arith.constant 0 : i32
    return %arg0, %arg1 : i32, i32
  }
  func.func @transform_1(%arg0: i32, %arg1: i32) -> (i32, i32) {
    %c0_i32 = arith.constant 0 : i32
    %c0_i32_0 = arith.constant 0 : i32
    %c0_i32_1 = arith.constant 0 : i32
    return %c0_i32, %c0_i32_0 : i32, i32
  }
  func.func @transform_2(%arg0: i32, %arg1: i32) -> (i32, i32) {
    %c0_i32 = arith.constant 0 : i32
    %c0_i32_0 = arith.constant 0 : i32
    %c0_i32_1 = arith.constant 0 : i32
    return %c0_i32, %c0_i32_0 : i32, i32
  }
  func.func @transform_3(%arg0: i32, %arg1: i32) -> (i32, i32) {
    %c0_i32 = arith.constant 0 : i32
    %c0_i32_0 = arith.constant 0 : i32
    %c0_i32_1 = arith.constant 0 : i32
    return %c0_i32, %c0_i32_0 : i32, i32
  }
  func.func @transform_4(%arg0: i32, %arg1: i32) -> (i32, i32) {
    %c0_i32 = arith.constant 0 : i32
    %c0_i32_0 = arith.constant 0 : i32
    %c0_i32_1 = arith.constant 0 : i32
    return %c0_i32, %c0_i32_0 : i32, i32
  }
  func.func @transform_5(%arg0: i32, %arg1: i32) -> (i32, i32) {
    %c0_i32 = arith.constant 0 : i32
    %c0_i32_0 = arith.constant 0 : i32
    %c0_i32_1 = arith.constant 0 : i32
    return %c0_i32, %c0_i32_0 : i32, i32
  }
  func.func @transform_6(%arg0: i32, %arg1: i32) -> (i32, i32) {
    %c0_i32 = arith.constant 0 : i32
    %c0_i32_0 = arith.constant 0 : i32
    return %arg0, %c0_i32 : i32, i32
  }
}

</mosaic_0001>

<llo_original>
// kernel: tpu_custom_call.1
$region0: #{tpu_custom_call.1}
  #allocation0 [shape = 'u32[]', space=smem, size = 0x4, offset = 0x4, fixed_abs, tag = 'smem constant byte address 0x4 - core index']
  #allocation1 [shape = 'u32[144,128]{1,0:T(1,128)}', space=vmem, size = 0x12000, scoped, tag = 'internal scratch']
  #allocation2 [shape = 'f32[128,128]{1,0:T(8,128)}', space=vmem, size = 0x10000, scoped, tag = 'scratch operand']
  %s0 = inlined_call_operand.hbm [shape: bf16[256,256], index: 0, kind: input, shape index: {}]
  %s1 = inlined_call_operand.hbm [shape: bf16[256,128], index: 1, kind: input, shape index: {}]
  %s2 = inlined_call_operand.hbm [shape: bf16[128,128], index: 2, kind: input, shape index: {}]
  %s3 = inlined_call_operand.vmem [shape: f32[1,128], index: 3, kind: input, shape index: {}]
  %s4 = inlined_call_operand.hbm [shape: bf16[128,128], index: 4, kind: input, shape index: {}]
  %s5 = inlined_call_operand.vmem [shape: f32[1,128], index: 5, kind: input, shape index: {}]
  %s6 = inlined_call_operand.hbm [shape: bf16[256,128], index: 6, kind: output, shape index: {}]
  %s7 = sld [smem:[#allocation0]]
  $region81: #{tpu_custom_call.1} parent=0
    _
  %s9 = ssub.s32 1, %s7
  %s10 = scalar_select 0, %s9, %s7
  $region1: #{tpu_custom_call.1} parent=0
    #allocation3 [shape = 'u8[131072]{0}', space=vmem, size = 0x20000, scoped, tag = 'input window, operand 0']
    #allocation4 [shape = 's32[2]{0}', space=sflag, size = 0x8, scoped, tag = 'scoped memory for tpu_custom_call.1']
    #allocation5 [shape = 's32[2]{0}', space=sflag, size = 0x8, scoped, tag = 'scoped memory for tpu_custom_call.1']
    #allocation6 [shape = 'u8[65536]{0}', space=vmem, size = 0x10000, scoped, tag = 'input window, operand 1, single buffered']
    #allocation7 [shape = 's32[1]{0}', space=sflag, size = 0x4, scoped, tag = 'scoped memory for tpu_custom_call.1']
    #allocation8 [shape = 'u8[32768]{0}', space=vmem, size = 0x8000, scoped, tag = 'input window, operand 2, single buffered']
    #allocation9 [shape = 'u8[32768]{0}', space=vmem, size = 0x8000, scoped, tag = 'input window, operand 4, single buffered']
    #allocation10 [shape = 's32[1]{0}', space=sflag, size = 0x4, scoped, tag = 'scoped memory for tpu_custom_call.1']
    #allocation11 [shape = 'u8[65536]{0}', space=vmem, size = 0x10000, scoped, tag = 'output window, operand 0']
    %11 = vsyncpa [#allocation4], 0
    %s12 = scalar_lea.sflag [#allocation4], 1
    %13 = vsyncpa %s12, 0
    %14 = vsyncpa [#allocation7], 0
    %15 = vsyncpa [#allocation10], 0
    %16 = vsyncpa [#allocation5], 0
    %s17 = scalar_lea.sflag [#allocation5], 1
    %18 = vsyncpa %s17, 0
    loop: start=0, step=1, limit=4
    $region2: #{tpu_custom_call.1} parent=1 // loop_pre_header
      _
    $region3: #{tpu_custom_call.1} parent=1 // loop_header
      %s20 = sphi 0, %s24
      %p21 = scmp.ge.s32.totalorder %s20, 4
      %s27 = sphi 0, %s39
      %s28 = sphi 0, %s35
      %s29 = sphi 0, %s27
      %s30 = sphi 0, %s28
      %s31 = sphi 0, %s29
      %s32 = sphi 0, %s30
      %s44 = sphi 0, %s46
      %s47 = sphi 0, %s44
      %s48 = sphi 0, %s47
      %s64 = sphi 0, %s48
      %s68 = sphi 0, %s68
      %s70 = sphi 0, %s68
      %s71 = sphi 0, %s70
      %s85 = sphi 0, %s71
      %s89 = sphi 0, %s89
      %s91 = sphi 0, %s89
      %s92 = sphi 0, %s91
      %s106 = sphi 0, %s92
      %s110 = sphi 0, %s110
      %s112 = sphi 0, %s110
      %s113 = sphi 0, %s112
      %s127 = sphi 0, %s113
      %s131 = sphi 0, %s131
      %s133 = sphi 0, %s131
      %s134 = sphi 0, %s133
      %s148 = sphi 0, %s134
      %s152 = sphi 0, %s152
      %s154 = sphi 0, %s152
      %s155 = sphi 0, %s154
      %s169 = sphi 0, %s155
      %s175 = sphi 0, %s177
      %s178 = sphi 0, %s175
      %s179 = sphi 0, %s178
      %s195 = sphi 0, %s179
    $region4: #{tpu_custom_call.1} parent=1 // loop_header_branch
      %23 = sbr.rel (%p21) target = $region8
    $region5: #{tpu_custom_call.1} parent=1 // loop_body
      %s25 = ssub.s32 %s20, 1
      %s26 = ssub.s32 %s20, 2
      %s33 = sadd.s32 1, %s28
      %p34 = scmp.ge.s32.totalorder %s33, 1
      %s35 = scalar_select %p34, 0, %s33
      %s36 = sadd.s32 1, %s27
      %s37 = scalar_select %p34, %s36, %s27
      %p38 = scmp.ge.s32.totalorder %s37, 2
      %s39 = scalar_select %p38, 0, %s37
      %s40 = ssub.s32 %s27, %s39
      %s41 = ssub.s32 %s28, %s35
      %s42 = sor.u32 %s40, %s41
      %p43 = scmp.eq.s32.totalorder %s42, 0
      %s45 = sadd.s32 %s44, 1
      %s46 = scalar_select %p43, %s44, %s45
      %p49 = pneg %p43
      %p50 = scmp.eq.s32.totalorder %s20, 1
      %p51 = por %p49, %p50
      %p52 = scmp.ne.s32.totalorder %s44, %s47
      %p53 = scmp.eq.s32.totalorder %s20, 0
      %p54 = por %p52, %p53
      %p55 = scmp.ne.s32.totalorder %s44, %s47
      %p56 = scmp.eq.s32.totalorder %s25, 1
      %p57 = por %p55, %p56
      %p58 = scmp.ne.s32.totalorder %s47, %s48
      %p59 = scmp.eq.s32.totalorder %s25, 0
      %p60 = por %p58, %p59
      %p61 = scmp.ne.s32.totalorder %s47, %s48
      %p62 = scmp.eq.s32.totalorder %s26, 1
      %p63 = por %p61, %p62
      %p65 = scmp.ne.s32.totalorder %s48, %s64
      %p66 = scmp.eq.s32.totalorder %s26, 0
      %p67 = por %p65, %p66
      %s69 = sadd.s32 %s68, 1
      %p72 = scmp.eq.s32.totalorder %s20, 1
      %p73 = scmp.ne.s32.totalorder %s68, %s70
      %p74 = scmp.eq.s32.totalorder %s20, 0
      %p75 = por %p73, %p74
      %p76 = scmp.ne.s32.totalorder %s68, %s70
      %p77 = scmp.eq.s32.totalorder %s25, 1
      %p78 = por %p76, %p77
      %p79 = scmp.ne.s32.totalorder %s70, %s71
      %p80 = scmp.eq.s32.totalorder %s25, 0
      %p81 = por %p79, %p80
      %p82 = scmp.ne.s32.totalorder %s70, %s71
      %p83 = scmp.eq.s32.totalorder %s26, 1
      %p84 = por %p82, %p83
      %p86 = scmp.ne.s32.totalorder %s71, %s85
      %p87 = scmp.eq.s32.totalorder %s26, 0
      %p88 = por %p86, %p87
      %s90 = sadd.s32 %s89, 1
      %p93 = scmp.eq.s32.totalorder %s20, 1
      %p94 = scmp.ne.s32.totalorder %s89, %s91
      %p95 = scmp.eq.s32.totalorder %s20, 0
      %p96 = por %p94, %p95
      %p97 = scmp.ne.s32.totalorder %s89, %s91
      %p98 = scmp.eq.s32.totalorder %s25, 1
      %p99 = por %p97, %p98
      %p100 = scmp.ne.s32.totalorder %s91, %s92
      %p101 = scmp.eq.s32.totalorder %s25, 0
      %p102 = por %p100, %p101
      %p103 = scmp.ne.s32.totalorder %s91, %s92
      %p104 = scmp.eq.s32.totalorder %s26, 1
      %p105 = por %p103, %p104
      %p107 = scmp.ne.s32.totalorder %s92, %s106
      %p108 = scmp.eq.s32.totalorder %s26, 0
      %p109 = por %p107, %p108
      %s111 = sadd.s32 %s110, 1
      %p114 = scmp.eq.s32.totalorder %s20, 1
      %p115 = scmp.ne.s32.totalorder %s110, %s112
      %p116 = scmp.eq.s32.totalorder %s20, 0
      %p117 = por %p115, %p116
      %p118 = scmp.ne.s32.totalorder %s110, %s112
      %p119 = scmp.eq.s32.totalorder %s25, 1
      %p120 = por %p118, %p119
      %p121 = scmp.ne.s32.totalorder %s112, %s113
      %p122 = scmp.eq.s32.totalorder %s25, 0
      %p123 = por %p121, %p122
      %p124 = scmp.ne.s32.totalorder %s112, %s113
      %p125 = scmp.eq.s32.totalorder %s26, 1
      %p126 = por %p124, %p125
      %p128 = scmp.ne.s32.totalorder %s113, %s127
      %p129 = scmp.eq.s32.totalorder %s26, 0
      %p130 = por %p128, %p129
      %s132 = sadd.s32 %s131, 1
      %p135 = scmp.eq.s32.totalorder %s20, 1
      %p136 = scmp.ne.s32.totalorder %s131, %s133
      %p137 = scmp.eq.s32.totalorder %s20, 0
      %p138 = por %p136, %p137
      %p139 = scmp.ne.s32.totalorder %s131, %s133
      %p140 = scmp.eq.s32.totalorder %s25, 1
      %p141 = por %p139, %p140
      %p142 = scmp.ne.s32.totalorder %s133, %s134
      %p143 = scmp.eq.s32.totalorder %s25, 0
      %p144 = por %p142, %p143
      %p145 = scmp.ne.s32.totalorder %s133, %s134
      %p146 = scmp.eq.s32.totalorder %s26, 1
      %p147 = por %p145, %p146
      %p149 = scmp.ne.s32.totalorder %s134, %s148
      %p150 = scmp.eq.s32.totalorder %s26, 0
      %p151 = por %p149, %p150
      %s153 = sadd.s32 %s152, 1
      %p156 = scmp.eq.s32.totalorder %s20, 1
      %p157 = scmp.ne.s32.totalorder %s152, %s154
      %p158 = scmp.eq.s32.totalorder %s20, 0
      %p159 = por %p157, %p158
      %p160 = scmp.ne.s32.totalorder %s152, %s154
      %p161 = scmp.eq.s32.totalorder %s25, 1
      %p162 = por %p160, %p161
      %p163 = scmp.ne.s32.totalorder %s154, %s155
      %p164 = scmp.eq.s32.totalorder %s25, 0
      %p165 = por %p163, %p164
      %p166 = scmp.ne.s32.totalorder %s154, %s155
      %p167 = scmp.eq.s32.totalorder %s26, 1
      %p168 = por %p166, %p167
      %p170 = scmp.ne.s32.totalorder %s155, %s169
      %p171 = scmp.eq.s32.totalorder %s26, 0
      %p172 = por %p170, %p171
      %s173 = ssub.s32 %s27, %s39
      %p174 = scmp.eq.s32.totalorder %s173, 0
      %s176 = sadd.s32 %s175, 1
      %s177 = scalar_select %p174, %s175, %s176
      %p180 = pneg %p174
      %p181 = scmp.eq.s32.totalorder %s20, 1
      %p182 = por %p180, %p181
      %p183 = scmp.ne.s32.totalorder %s175, %s178
      %p184 = scmp.eq.s32.totalorder %s20, 0
      %p185 = por %p183, %p184
      %p186 = scmp.ne.s32.totalorder %s175, %s178
      %p187 = scmp.eq.s32.totalorder %s25, 1
      %p188 = por %p186, %p187
      %p189 = scmp.ne.s32.totalorder %s178, %s179
      %p190 = scmp.eq.s32.totalorder %s25, 0
      %p191 = por %p189, %p190
      %p192 = scmp.ne.s32.totalorder %s178, %s179
      %p193 = scmp.eq.s32.totalorder %s26, 1
      %p194 = por %p192, %p193
      %p196 = scmp.ne.s32.totalorder %s179, %s195
      %p197 = scmp.eq.s32.totalorder %s26, 0
      %p198 = por %p196, %p197
      %p199 = scmp.le.s32.totalorder 1, %s20
      %p200 = scmp.lt.s32.totalorder %s20, 3
      %p201 = pnand %p199, %p200
      %p202 = pneg %p201
      // Predicated region
      $region9: #{tpu_custom_call.1} parent=5 // pred_check
        _
      $region10: #{tpu_custom_call.1} parent=5 // pred_check_branch
        %204 = sbr.rel (%p201) target = $region12
      $region11: #{tpu_custom_call.1} parent=5 // pred_region
        %s205 = ssub.s32 %s20, 1
        // Predicated region
        $region13: #{tpu_custom_call.1} parent=11 // pred_check
          %p206 = pneg %p81
        $region14: #{tpu_custom_call.1} parent=11 // pred_check_branch
          %208 = sbr.rel (%p206) target = $region16
        $region15: #{tpu_custom_call.1} parent=11 // pred_region
          %s210 = ssub.s32 2048, 2048
          %211 = vsyncadd [#allocation7], %s210
          %s212 = sshll.u32 [#allocation6], 4
          %s213 = int_to_ptr.vmem [resolvable:$true] %s212
          %218 = dma.hbm_to_vmem [thread:$0]  %s1, 2048, %s213, [#allocation7], 64, 64, 4
        $region16: #{tpu_custom_call.1} parent=11 // pred_fallthru
          _
        // Predicated region
        $region17: #{tpu_custom_call.1} parent=11 // pred_check
          %p219 = pneg %p102
        $region18: #{tpu_custom_call.1} parent=11 // pred_check_branch
          %221 = sbr.rel (%p219) target = $region20
        $region19: #{tpu_custom_call.1} parent=11 // pred_region
          %s223 = ssub.s32 1024, 1024
          %224 = vsyncadd [#allocation7], %s223
          %s225 = sshll.u32 [#allocation8], 4
          %s226 = int_to_ptr.vmem [resolvable:$true] %s225
          %231 = dma.hbm_to_vmem [thread:$0]  %s2, 1024, %s226, [#allocation7], 64, 64, 4
        $region20: #{tpu_custom_call.1} parent=11 // pred_fallthru
          _
        // Predicated region
        $region21: #{tpu_custom_call.1} parent=11 // pred_check
          %p232 = pneg %p123
        $region22: #{tpu_custom_call.1} parent=11 // pred_check_branch
          %234 = sbr.rel (%p232) target = $region24
        $region23: #{tpu_custom_call.1} parent=11 // pred_region
          _
        $region24: #{tpu_custom_call.1} parent=11 // pred_fallthru
          _
        // Predicated region
        $region25: #{tpu_custom_call.1} parent=11 // pred_check
          %p235 = pneg %p144
        $region26: #{tpu_custom_call.1} parent=11 // pred_check_branch
          %237 = sbr.rel (%p235) target = $region28
        $region27: #{tpu_custom_call.1} parent=11 // pred_region
          %s239 = ssub.s32 1024, 1024
          %240 = vsyncadd [#allocation10], %s239
          %s241 = sshll.u32 [#allocation9], 4
          %s242 = int_to_ptr.vmem [resolvable:$true] %s241
          %247 = dma.hbm_to_vmem [thread:$0]  %s4, 1024, %s242, [#allocation10], 64, 64, 4
        $region28: #{tpu_custom_call.1} parent=11 // pred_fallthru
          _
        // Predicated region
        $region29: #{tpu_custom_call.1} parent=11 // pred_check
          %p248 = pneg %p165
        $region30: #{tpu_custom_call.1} parent=11 // pred_check_branch
          %250 = sbr.rel (%p248) target = $region32
        $region31: #{tpu_custom_call.1} parent=11 // pred_region
          _
        $region32: #{tpu_custom_call.1} parent=11 // pred_fallthru
          _
      $region12: #{tpu_custom_call.1} parent=5 // pred_fallthru
        _
      %p251 = scmp.lt.s32.totalorder %s20, 2
      // Predicated region
      $region33: #{tpu_custom_call.1} parent=5 // pred_check
        %p252 = pneg %p251
      $region34: #{tpu_custom_call.1} parent=5 // pred_check_branch
        %254 = sbr.rel (%p252) target = $region36
      $region35: #{tpu_custom_call.1} parent=5 // pred_region
        // Predicated region
        $region37: #{tpu_custom_call.1} parent=35 // pred_check
          %p255 = pneg %p54
        $region38: #{tpu_custom_call.1} parent=35 // pred_check_branch
          %257 = sbr.rel (%p255) target = $region40
        $region39: #{tpu_custom_call.1} parent=35 // pred_region
          %s258 = sand.u32 %s44, 1
          %s259 = scalar_lea.sflag [#allocation4], %s258
          %s260 = sand.u32 %s44, 1
          %s261 = smul.addr %s260, 128
          %s262 = scalar_lea.vmem [#allocation3], %s261
          %s263 = smul.u32 16, %s27
          %s264 = smul.u32 2, %s28
          %s266 = ssub.s32 2048, 2048
          %267 = vsyncadd %s259, %s266
          %s268 = smul.addr %s263, 2
          %s269 = sadd.s32 %s264, %s268
          %s270 = smul.addr %s269, 64
          %s271 = scalar_lea.hbm %s0, %s270
          %s272 = sshll.u32 %s262, 4
          %s273 = int_to_ptr.vmem [resolvable:$true] %s272
          %278 = dma.hbm_to_vmem [thread:$0]  %s271, 2048, %s273, %s259, 128, 128, 8
        $region40: #{tpu_custom_call.1} parent=35 // pred_fallthru
          _
      $region36: #{tpu_custom_call.1} parent=5 // pred_fallthru
        _
      %p279 = scmp.le.s32.totalorder 1, %s20
      %p280 = scmp.lt.s32.totalorder %s20, 3
      %p281 = pnand %p279, %p280
      %p282 = pneg %p281
      // Predicated region
      $region41: #{tpu_custom_call.1} parent=5 // pred_check
        _
      $region42: #{tpu_custom_call.1} parent=5 // pred_check_branch
        %284 = sbr.rel (%p281) target = $region44
      $region43: #{tpu_custom_call.1} parent=5 // pred_region
        %s285 = ssub.s32 %s20, 1
        %s286 = sand.u32 %s47, 1
        %s287 = scalar_lea.sflag [#allocation4], %s286
        %s288 = sand.u32 %s47, 1
        %s289 = smul.addr %s288, 128
        %s290 = scalar_lea.vmem [#allocation3], %s289
        // Predicated region
        $region45: #{tpu_custom_call.1} parent=43 // pred_check
          %p291 = pneg %p60
        $region46: #{tpu_custom_call.1} parent=43 // pred_check_branch
          %293 = sbr.rel (%p291) target = $region48
        $region47: #{tpu_custom_call.1} parent=43 // pred_region
          %294 = dma.done %s287, 2048
        $region48: #{tpu_custom_call.1} parent=43 // pred_fallthru
          _
        // Predicated region
        $region49: #{tpu_custom_call.1} parent=43 // pred_check
          %p295 = pneg %p81
        $region50: #{tpu_custom_call.1} parent=43 // pred_check_branch
          %297 = sbr.rel (%p295) target = $region52
        $region51: #{tpu_custom_call.1} parent=43 // pred_region
          %298 = dma.done [#allocation7], 2048
        $region52: #{tpu_custom_call.1} parent=43 // pred_fallthru
          _
        // Predicated region
        $region53: #{tpu_custom_call.1} parent=43 // pred_check
          %p299 = pneg %p102
        $region54: #{tpu_custom_call.1} parent=43 // pred_check_branch
          %301 = sbr.rel (%p299) target = $region56
        $region55: #{tpu_custom_call.1} parent=43 // pred_region
          %302 = dma.done [#allocation7], 1024
        $region56: #{tpu_custom_call.1} parent=43 // pred_fallthru
          _
        // Predicated region
        $region57: #{tpu_custom_call.1} parent=43 // pred_check
          %p303 = pneg %p144
        $region58: #{tpu_custom_call.1} parent=43 // pred_check_branch
          %305 = sbr.rel (%p303) target = $region60
        $region59: #{tpu_custom_call.1} parent=43 // pred_region
          %306 = dma.done [#allocation10], 1024
        $region60: #{tpu_custom_call.1} parent=43 // pred_fallthru
          _
        %s307 = sand.u32 %s47, 1
        %s308 = scalar_lea.sflag [#allocation4], %s307
        %s309 = sand.u32 %s47, 1
        %s310 = smul.addr %s309, 128
        %s311 = scalar_lea.vmem [#allocation3], %s310
        %p312 = pneg %p60
        %p313 = pneg %p57
        %p314 = pneg %p81
        %p315 = pneg %p78
        %p316 = pneg %p102
        %p317 = pneg %p99
        %p318 = pneg %p123
        %p319 = pneg %p120
        %p320 = pneg %p144
        %p321 = pneg %p141
        %p322 = pneg %p165
        %p323 = pneg %p162
        %p324 = pneg %p191
        %p325 = pneg %p188
        %s326 = sand.u32 %s178, 1
        %s327 = scalar_lea.sflag [#allocation5], %s326
        %s328 = sand.u32 %s178, 1
        %s329 = smul.addr %s328, 64
        %s330 = scalar_lea.vmem [#allocation11], %s329
        %s331 = smul.u32 16, %s29
        %s332 = smul.u32 2, %s30
        %s333 = smul.u32 16, %s29
        %s335 = smul.u32 %s29, 128
        %s336 = smul.u32 %s30, 256
        %p337 = scmp.eq.s32.totalorder %s30, 0
        // Predicated region
        $region61: #{tpu_custom_call.1} parent=43 // pred_check
          %p338 = pneg %p337
        $region62: #{tpu_custom_call.1} parent=43 // pred_check_branch
          %340 = sbr.rel (%p338) target = $region64
        $region63: #{tpu_custom_call.1} parent=43 // pred_region
          %s341 = sshra.s32 %s335, 3
          %s342 = sand.u32 %s335, 7
          %s343 = smul.addr %s341, 4
          %s344 = scalar_lea.vmem [#allocation6], %s343
          %v345 = vld [vmem:[%s344] sm:$0xf]
          %v346 = vld [vmem:[%s344 + $0x4] sm:$0xf]
          %v347 = vld [vmem:[%s344 + $0x8] sm:$0xf]
          %v348 = vld [vmem:[%s344 + $0xc] sm:$0xf]
          %v349 = vld [vmem:[%s344 + $0x10] sm:$0xf]
          %v350 = vld [vmem:[%s344 + $0x14] sm:$0xf]
          %v351 = vld [vmem:[%s344 + $0x18] sm:$0xf]
          %v352 = vld [vmem:[%s344 + $0x1c] sm:$0xf]
          %v353 = vld [vmem:[%s344 + $0x20] sm:$0xf]
          %v354 = vld [vmem:[%s344 + $0x24] sm:$0xf]
          %v355 = vld [vmem:[%s344 + $0x28] sm:$0xf]
          %v356 = vld [vmem:[%s344 + $0x2c] sm:$0xf]
          %v357 = vld [vmem:[%s344 + $0x30] sm:$0xf]
          %v358 = vld [vmem:[%s344 + $0x34] sm:$0xf]
          %v359 = vld [vmem:[%s344 + $0x38] sm:$0xf]
          %v360 = vld [vmem:[%s344 + $0x3c] sm:$0xf]
          %v361 = vunpack.c.l.bf16 %v345
          %v362 = vunpack.c.l.bf16 %v346
          %v363 = vunpack.c.l.bf16 %v347
          %v364 = vunpack.c.l.bf16 %v348
          %v365 = vunpack.c.l.bf16 %v349
          %v366 = vunpack.c.l.bf16 %v350
          %v367 = vunpack.c.l.bf16 %v351
          %v368 = vunpack.c.l.bf16 %v352
          %v369 = vunpack.c.l.bf16 %v353
          %v370 = vunpack.c.l.bf16 %v354
          %v371 = vunpack.c.l.bf16 %v355
          %v372 = vunpack.c.l.bf16 %v356
          %v373 = vunpack.c.l.bf16 %v357
          %v374 = vunpack.c.l.bf16 %v358
          %v375 = vunpack.c.l.bf16 %v359
          %v376 = vunpack.c.l.bf16 %v360
          %377 = vst [vmem:[#allocation2] sm:$0xff] %v361
          %378 = vst [vmem:[#allocation2 + $0x8] sm:$0xff] %v362
          %379 = vst [vmem:[#allocation2 + $0x10] sm:$0xff] %v363
          %380 = vst [vmem:[#allocation2 + $0x18] sm:$0xff] %v364
          %381 = vst [vmem:[#allocation2 + $0x20] sm:$0xff] %v365
          %382 = vst [vmem:[#allocation2 + $0x28] sm:$0xff] %v366
          %383 = vst [vmem:[#allocation2 + $0x30] sm:$0xff] %v367
          %384 = vst [vmem:[#allocation2 + $0x38] sm:$0xff] %v368
          %385 = vst [vmem:[#allocation2 + $0x40] sm:$0xff] %v369
          %386 = vst [vmem:[#allocation2 + $0x48] sm:$0xff] %v370
          %387 = vst [vmem:[#allocation2 + $0x50] sm:$0xff] %v371
          %388 = vst [vmem:[#allocation2 + $0x58] sm:$0xff] %v372
          %389 = vst [vmem:[#allocation2 + $0x60] sm:$0xff] %v373
          %390 = vst [vmem:[#allocation2 + $0x68] sm:$0xff] %v374
          %391 = vst [vmem:[#allocation2 + $0x70] sm:$0xff] %v375
          %392 = vst [vmem:[#allocation2 + $0x78] sm:$0xff] %v376
        $region64: #{tpu_custom_call.1} parent=43 // pred_fallthru
          _
        %v393 = vld [vmem:[#allocation2] sm:$0xff]
        %v394 = vld [vmem:[#allocation2 + $0x8] sm:$0xff]
        %v395 = vld [vmem:[#allocation2 + $0x10] sm:$0xff]
        %v396 = vld [vmem:[#allocation2 + $0x18] sm:$0xff]
        %v397 = vld [vmem:[#allocation2 + $0x20] sm:$0xff]
        %v398 = vld [vmem:[#allocation2 + $0x28] sm:$0xff]
        %v399 = vld [vmem:[#allocation2 + $0x30] sm:$0xff]
        %v400 = vld [vmem:[#allocation2 + $0x38] sm:$0xff]
        %v401 = vld [vmem:[#allocation2 + $0x40] sm:$0xff]
        %v402 = vld [vmem:[#allocation2 + $0x48] sm:$0xff]
        %v403 = vld [vmem:[#allocation2 + $0x50] sm:$0xff]
        %v404 = vld [vmem:[#allocation2 + $0x58] sm:$0xff]
        %v405 = vld [vmem:[#allocation2 + $0x60] sm:$0xff]
        %v406 = vld [vmem:[#allocation2 + $0x68] sm:$0xff]
        %v407 = vld [vmem:[#allocation2 + $0x70] sm:$0xff]
        %v408 = vld [vmem:[#allocation2 + $0x78] sm:$0xff]
        %v409 = vld [vmem:[%s290] sm:$0xff]
        %v410 = vld [vmem:[%s290 + $0x8] sm:$0xff]
        %v411 = vld [vmem:[%s290 + $0x10] sm:$0xff]
        %v412 = vld [vmem:[%s290 + $0x18] sm:$0xff]
        %v413 = vld [vmem:[%s290 + $0x20] sm:$0xff]
        %v414 = vld [vmem:[%s290 + $0x28] sm:$0xff]
        %v415 = vld [vmem:[%s290 + $0x30] sm:$0xff]
        %v416 = vld [vmem:[%s290 + $0x38] sm:$0xff]
        %v417 = vld [vmem:[%s290 + $0x40] sm:$0xff]
        %v418 = vld [vmem:[%s290 + $0x48] sm:$0xff]
        %v419 = vld [vmem:[%s290 + $0x50] sm:$0xff]
        %v420 = vld [vmem:[%s290 + $0x58] sm:$0xff]
        %v421 = vld [vmem:[%s290 + $0x60] sm:$0xff]
        %v422 = vld [vmem:[%s290 + $0x68] sm:$0xff]
        %v423 = vld [vmem:[%s290 + $0x70] sm:$0xff]
        %v424 = vld [vmem:[%s290 + $0x78] sm:$0xff]
        %s425 = sshra.s32 %s336, 3
        %s426 = sand.u32 %s336, 7
        %s427 = smul.addr %s425, 4
        %s428 = scalar_lea.vmem [#allocation6], %s427
        %v429 = vld [vmem:[%s428] sm:$0xf]
        %v430 = vld [vmem:[%s428 + $0x4] sm:$0xf]
        %v431 = vld [vmem:[%s428 + $0x8] sm:$0xf]
        %v432 = vld [vmem:[%s428 + $0xc] sm:$0xf]
        %v433 = vld [vmem:[%s428 + $0x10] sm:$0xf]
        %v434 = vld [vmem:[%s428 + $0x14] sm:$0xf]
        %v435 = vld [vmem:[%s428 + $0x18] sm:$0xf]
        %v436 = vld [vmem:[%s428 + $0x1c] sm:$0xf]
        %v437 = vld [vmem:[%s428 + $0x20] sm:$0xf]
        %v438 = vld [vmem:[%s428 + $0x24] sm:$0xf]
        %v439 = vld [vmem:[%s428 + $0x28] sm:$0xf]
        %v440 = vld [vmem:[%s428 + $0x2c] sm:$0xf]
        %v441 = vld [vmem:[%s428 + $0x30] sm:$0xf]
        %v442 = vld [vmem:[%s428 + $0x34] sm:$0xf]
        %v443 = vld [vmem:[%s428 + $0x38] sm:$0xf]
        %v444 = vld [vmem:[%s428 + $0x3c] sm:$0xf]
        %v445 = vld [vmem:[%s428 + $0x40] sm:$0xf]
        %v446 = vld [vmem:[%s428 + $0x44] sm:$0xf]
        %v447 = vld [vmem:[%s428 + $0x48] sm:$0xf]
        %v448 = vld [vmem:[%s428 + $0x4c] sm:$0xf]
        %v449 = vld [vmem:[%s428 + $0x50] sm:$0xf]
        %v450 = vld [vmem:[%s428 + $0x54] sm:$0xf]
        %v451 = vld [vmem:[%s428 + $0x58] sm:$0xf]
        %v452 = vld [vmem:[%s428 + $0x5c] sm:$0xf]
        %v453 = vld [vmem:[%s428 + $0x60] sm:$0xf]
        %v454 = vld [vmem:[%s428 + $0x64] sm:$0xf]
        %v455 = vld [vmem:[%s428 + $0x68] sm:$0xf]
        %v456 = vld [vmem:[%s428 + $0x6c] sm:$0xf]
        %v457 = vld [vmem:[%s428 + $0x70] sm:$0xf]
        %v458 = vld [vmem:[%s428 + $0x74] sm:$0xf]
        %v459 = vld [vmem:[%s428 + $0x78] sm:$0xf]
        %v460 = vld [vmem:[%s428 + $0x7c] sm:$0xf]
        %v477 = vunpack.c.l.b16 %v409
        %v478 = vunpack.c.h.b16 %v409
        %v479 = vunpack.c.l.b16 %v410
        %v480 = vunpack.c.h.b16 %v410
        %v481 = vunpack.c.l.b16 %v411
        %v482 = vunpack.c.h.b16 %v411
        %v483 = vunpack.c.l.b16 %v412
        %v484 = vunpack.c.h.b16 %v412
        %v485 = vunpack.c.l.b16 %v413
        %v486 = vunpack.c.h.b16 %v413
        %v487 = vunpack.c.l.b16 %v414
        %v488 = vunpack.c.h.b16 %v414
        %v489 = vunpack.c.l.b16 %v415
        %v490 = vunpack.c.h.b16 %v415
        %v491 = vunpack.c.l.b16 %v416
        %v492 = vunpack.c.h.b16 %v416
        %v493 = vunpack.c.l.b16 %v417
        %v494 = vunpack.c.h.b16 %v417
        %v495 = vunpack.c.l.b16 %v418
        %v496 = vunpack.c.h.b16 %v418
        %v497 = vunpack.c.l.b16 %v419
        %v498 = vunpack.c.h.b16 %v419
        %v499 = vunpack.c.l.b16 %v420
        %v500 = vunpack.c.h.b16 %v420
        %v501 = vunpack.c.l.b16 %v421
        %v502 = vunpack.c.h.b16 %v421
        %v503 = vunpack.c.l.b16 %v422
        %v504 = vunpack.c.h.b16 %v422
        %v505 = vunpack.c.l.b16 %v423
        %v506 = vunpack.c.h.b16 %v423
        %v507 = vunpack.c.l.b16 %v424
        %v508 = vunpack.c.h.b16 %v424
        %v509 = vpack.c.b16 %v479, %v477
        %v510 = vpack.c.b16 %v480, %v478
        %v511 = vpack.c.b16 %v483, %v481
        %v512 = vpack.c.b16 %v484, %v482
        %v513 = vpack.c.b16 %v487, %v485
        %v514 = vpack.c.b16 %v488, %v486
        %v515 = vpack.c.b16 %v491, %v489
        %v516 = vpack.c.b16 %v492, %v490
        %v517 = vpack.c.b16 %v495, %v493
        %v518 = vpack.c.b16 %v496, %v494
        %v519 = vpack.c.b16 %v499, %v497
        %v520 = vpack.c.b16 %v500, %v498
        %v521 = vpack.c.b16 %v503, %v501
        %v522 = vpack.c.b16 %v504, %v502
        %v523 = vpack.c.b16 %v507, %v505
        %v524 = vpack.c.b16 %v508, %v506
        %v573 = vunpack.c.l.b16 %v429
        %v574 = vunpack.c.l.b16 %v430
        %v575 = vunpack.c.l.b16 %v431
        %v576 = vunpack.c.l.b16 %v432
        %v577 = vunpack.c.l.b16 %v433
        %v578 = vunpack.c.l.b16 %v434
        %v579 = vunpack.c.l.b16 %v435
        %v580 = vunpack.c.l.b16 %v436
        %v581 = vunpack.c.l.b16 %v437
        %v582 = vunpack.c.l.b16 %v438
        %v583 = vunpack.c.l.b16 %v439
        %v584 = vunpack.c.l.b16 %v440
        %v585 = vunpack.c.l.b16 %v441
        %v586 = vunpack.c.l.b16 %v442
        %v587 = vunpack.c.l.b16 %v443
        %v588 = vunpack.c.l.b16 %v444
        %v589 = vunpack.c.l.b16 %v445
        %v590 = vunpack.c.l.b16 %v446
        %v591 = vunpack.c.l.b16 %v447
        %v592 = vunpack.c.l.b16 %v448
        %v593 = vunpack.c.l.b16 %v449
        %v594 = vunpack.c.l.b16 %v450
        %v595 = vunpack.c.l.b16 %v451
        %v596 = vunpack.c.l.b16 %v452
        %v597 = vunpack.c.l.b16 %v453
        %v598 = vunpack.c.l.b16 %v454
        %v599 = vunpack.c.l.b16 %v455
        %v600 = vunpack.c.l.b16 %v456
        %v601 = vunpack.c.l.b16 %v457
        %v602 = vunpack.c.l.b16 %v458
        %v603 = vunpack.c.l.b16 %v459
        %v604 = vunpack.c.l.b16 %v460
        %v605 = vpack.c.b16 %v574, %v573
        %v606 = vpack.c.b16 %v576, %v575
        %v607 = vpack.c.b16 %v578, %v577
        %v608 = vpack.c.b16 %v580, %v579
        %v609 = vpack.c.b16 %v582, %v581
        %v610 = vpack.c.b16 %v584, %v583
        %v611 = vpack.c.b16 %v586, %v585
        %v612 = vpack.c.b16 %v588, %v587
        %v613 = vpack.c.b16 %v590, %v589
        %v614 = vpack.c.b16 %v592, %v591
        %v615 = vpack.c.b16 %v594, %v593
        %v616 = vpack.c.b16 %v596, %v595
        %v617 = vpack.c.b16 %v598, %v597
        %v618 = vpack.c.b16 %v600, %v599
        %v619 = vpack.c.b16 %v602, %v601
        %v620 = vpack.c.b16 %v604, %v603
        %637 = vmatprep.subr.bf16.mxu0 0
        %638 = vmatpush1.bf16.msra.mxu0 %v612
        %639 = vmatprep.subr.bf16.mxu0 0
        %640 = vmatpush1.bf16.msra.mxu0 %v611
        %641 = vmatprep.subr.bf16.mxu0 0
        %642 = vmatpush1.bf16.msra.mxu0 %v610
        %643 = vmatprep.subr.bf16.mxu0 0
        %644 = vmatpush1.bf16.msra.mxu0 %v609
        %645 = vmatprep.subr.bf16.mxu0 0
        %646 = vmatpush1.bf16.msra.mxu0 %v608
        %647 = vmatprep.subr.bf16.mxu0 0
        %648 = vmatpush1.bf16.msra.mxu0 %v607
        %649 = vmatprep.subr.bf16.mxu0 0
        %650 = vmatpush1.bf16.msra.mxu0 %v606
        %651 = vmatprep.subr.bf16.mxu0 0
        %652 = vmatpush1.bf16.msra.mxu0 %v605
        %653 = vmatprep.subr.bf16.mxu0 0
        %654 = vmatpush2.bf16.msra.mxu0 %v620
        %655 = vmatprep.subr.bf16.mxu0 0
        %656 = vmatpush2.bf16.msra.mxu0 %v619
        %657 = vmatprep.subr.bf16.mxu0 0
        %658 = vmatpush2.bf16.msra.mxu0 %v618
        %659 = vmatprep.subr.bf16.mxu0 0
        %660 = vmatpush2.bf16.msra.mxu0 %v617
        %661 = vmatprep.subr.bf16.mxu0 0
        %662 = vmatpush2.bf16.msra.mxu0 %v616
        %663 = vmatprep.subr.bf16.mxu0 0
        %664 = vmatpush2.bf16.msra.mxu0 %v615
        %665 = vmatprep.subr.bf16.mxu0 0
        %666 = vmatpush2.bf16.msra.mxu0 %v614
        %667 = vmatprep.subr.bf16.mxu0 0
        %668 = vmatpush2.bf16.msra.mxu0 %v613
        %669 = vmatprep.mubr.bf16.mxu0 %v510
        %670 = vmatmul.mubr.bf16.gmra.mxu0 %v509
        %v671 = vpop.f32.mrf.mxu0
        %v672 = vadd.f32 0.0, %v671
        %v673 = vpop.f32.mrf.mxu0
        %v674 = vpop.f32.mrf.mxu0
        %v675 = vadd.f32 0.0, %v674
        %v676 = vpop.f32.mrf.mxu0
        %677 = vmatprep.mubr.bf16.mxu0 %v512
        %678 = vmatmul.mubr.bf16.gmra.mxu0 %v511
        %v679 = vpop.f32.mrf.mxu0
        %v680 = vadd.f32 0.0, %v679
        %v681 = vpop.f32.mrf.mxu0
        %v682 = vpop.f32.mrf.mxu0
        %v683 = vadd.f32 0.0, %v682
        %v684 = vpop.f32.mrf.mxu0
        %685 = vmatprep.mubr.bf16.mxu0 %v514
        %686 = vmatmul.mubr.bf16.gmra.mxu0 %v513
        %v687 = vpop.f32.mrf.mxu0
        %v688 = vadd.f32 0.0, %v687
        %v689 = vpop.f32.mrf.mxu0
        %v690 = vpop.f32.mrf.mxu0
        %v691 = vadd.f32 0.0, %v690
        %v692 = vpop.f32.mrf.mxu0
        %693 = vmatprep.mubr.bf16.mxu0 %v516
        %694 = vmatmul.mubr.bf16.gmra.mxu0 %v515
        %v695 = vpop.f32.mrf.mxu0
        %v696 = vadd.f32 0.0, %v695
        %v697 = vpop.f32.mrf.mxu0
        %v698 = vpop.f32.mrf.mxu0
        %v699 = vadd.f32 0.0, %v698
        %v700 = vpop.f32.mrf.mxu0
        %701 = vmatprep.mubr.bf16.mxu0 %v518
        %702 = vmatmul.mubr.bf16.gmra.mxu0 %v517
        %v703 = vpop.f32.mrf.mxu0
        %v704 = vadd.f32 0.0, %v703
        %v705 = vpop.f32.mrf.mxu0
        %v706 = vpop.f32.mrf.mxu0
        %v707 = vadd.f32 0.0, %v706
        %v708 = vpop.f32.mrf.mxu0
        %709 = vmatprep.mubr.bf16.mxu0 %v520
        %710 = vmatmul.mubr.bf16.gmra.mxu0 %v519
        %v711 = vpop.f32.mrf.mxu0
        %v712 = vadd.f32 0.0, %v711
        %v713 = vpop.f32.mrf.mxu0
        %v714 = vpop.f32.mrf.mxu0
        %v715 = vadd.f32 0.0, %v714
        %v716 = vpop.f32.mrf.mxu0
        %717 = vmatprep.mubr.bf16.mxu0 %v522
        %718 = vmatmul.mubr.bf16.gmra.mxu0 %v521
        %v719 = vpop.f32.mrf.mxu0
        %v720 = vadd.f32 0.0, %v719
        %v721 = vpop.f32.mrf.mxu0
        %v722 = vpop.f32.mrf.mxu0
        %v723 = vadd.f32 0.0, %v722
        %v724 = vpop.f32.mrf.mxu0
        %725 = vmatprep.mubr.bf16.mxu0 %v524
        %726 = vmatmul.mubr.bf16.gmra.mxu0 %v523
        %v727 = vpop.f32.mrf.mxu0
        %v728 = vadd.f32 0.0, %v727
        %v729 = vpop.f32.mrf.mxu0
        %v730 = vpop.f32.mrf.mxu0
        %v731 = vadd.f32 0.0, %v730
        %v732 = vpop.f32.mrf.mxu0
        %733 = vdwg.mxu0
        %v734 = vadd.f32 %v393, %v672
        %v735 = vadd.f32 %v394, %v675
        %v736 = vadd.f32 %v395, %v680
        %v737 = vadd.f32 %v396, %v683
        %v738 = vadd.f32 %v397, %v688
        %v739 = vadd.f32 %v398, %v691
        %v740 = vadd.f32 %v399, %v696
        %v741 = vadd.f32 %v400, %v699
        %v742 = vadd.f32 %v401, %v704
        %v743 = vadd.f32 %v402, %v707
        %v744 = vadd.f32 %v403, %v712
        %v745 = vadd.f32 %v404, %v715
        %v746 = vadd.f32 %v405, %v720
        %v747 = vadd.f32 %v406, %v723
        %v748 = vadd.f32 %v407, %v728
        %v749 = vadd.f32 %v408, %v731
        %750 = vst [vmem:[#allocation2] sm:$0xff] %v734
        %751 = vst [vmem:[#allocation2 + $0x8] sm:$0xff] %v735
        %752 = vst [vmem:[#allocation2 + $0x10] sm:$0xff] %v736
        %753 = vst [vmem:[#allocation2 + $0x18] sm:$0xff] %v737
        %754 = vst [vmem:[#allocation2 + $0x20] sm:$0xff] %v738
        %755 = vst [vmem:[#allocation2 + $0x28] sm:$0xff] %v739
        %756 = vst [vmem:[#allocation2 + $0x30] sm:$0xff] %v740
        %757 = vst [vmem:[#allocation2 + $0x38] sm:$0xff] %v741
        %758 = vst [vmem:[#allocation2 + $0x40] sm:$0xff] %v742
        %759 = vst [vmem:[#allocation2 + $0x48] sm:$0xff] %v743
        %760 = vst [vmem:[#allocation2 + $0x50] sm:$0xff] %v744
        %761 = vst [vmem:[#allocation2 + $0x58] sm:$0xff] %v745
        %762 = vst [vmem:[#allocation2 + $0x60] sm:$0xff] %v746
        %763 = vst [vmem:[#allocation2 + $0x68] sm:$0xff] %v747
        %764 = vst [vmem:[#allocation2 + $0x70] sm:$0xff] %v748
        %765 = vst [vmem:[#allocation2 + $0x78] sm:$0xff] %v749
        // Predicated region
        $region65: #{tpu_custom_call.1} parent=43 // pred_check
          %p766 = pneg %p337
        $region66: #{tpu_custom_call.1} parent=43 // pred_check_branch
          %768 = sbr.rel (%p766) target = $region68
        $region67: #{tpu_custom_call.1} parent=43 // pred_region
          %v769 = vld [vmem:[#allocation2] sm:$0xff]
          %v770 = vld [vmem:[#allocation2 + $0x8] sm:$0xff]
          %v771 = vld [vmem:[#allocation2 + $0x10] sm:$0xff]
          %v772 = vld [vmem:[#allocation2 + $0x18] sm:$0xff]
          %v773 = vld [vmem:[#allocation2 + $0x20] sm:$0xff]
          %v774 = vld [vmem:[#allocation2 + $0x28] sm:$0xff]
          %v775 = vld [vmem:[#allocation2 + $0x30] sm:$0xff]
          %v776 = vld [vmem:[#allocation2 + $0x38] sm:$0xff]
          %v777 = vld [vmem:[#allocation2 + $0x40] sm:$0xff]
          %v778 = vld [vmem:[#allocation2 + $0x48] sm:$0xff]
          %v779 = vld [vmem:[#allocation2 + $0x50] sm:$0xff]
          %v780 = vld [vmem:[#allocation2 + $0x58] sm:$0xff]
          %v781 = vld [vmem:[#allocation2 + $0x60] sm:$0xff]
          %v782 = vld [vmem:[#allocation2 + $0x68] sm:$0xff]
          %v783 = vld [vmem:[#allocation2 + $0x70] sm:$0xff]
          %v784 = vld [vmem:[#allocation2 + $0x78] sm:$0xff]
          %v785 = vpack.c.bf16 %v770, %v769
          %v786 = vpack.c.bf16 %v772, %v771
          %v787 = vpack.c.bf16 %v774, %v773
          %v788 = vpack.c.bf16 %v776, %v775
          %v789 = vpack.c.bf16 %v778, %v777
          %v790 = vpack.c.bf16 %v780, %v779
          %v791 = vpack.c.bf16 %v782, %v781
          %v792 = vpack.c.bf16 %v784, %v783
          %v793 = vld [vmem:[#allocation8] sm:$0xf]
          %v794 = vld [vmem:[#allocation8 + $0x4] sm:$0xf]
          %v795 = vld [vmem:[#allocation8 + $0x8] sm:$0xf]
          %v796 = vld [vmem:[#allocation8 + $0xc] sm:$0xf]
          %v797 = vld [vmem:[#allocation8 + $0x10] sm:$0xf]
          %v798 = vld [vmem:[#allocation8 + $0x14] sm:$0xf]
          %v799 = vld [vmem:[#allocation8 + $0x18] sm:$0xf]
          %v800 = vld [vmem:[#allocation8 + $0x1c] sm:$0xf]
          %v801 = vld [vmem:[#allocation8 + $0x20] sm:$0xf]
          %v802 = vld [vmem:[#allocation8 + $0x24] sm:$0xf]
          %v803 = vld [vmem:[#allocation8 + $0x28] sm:$0xf]
          %v804 = vld [vmem:[#allocation8 + $0x2c] sm:$0xf]
          %v805 = vld [vmem:[#allocation8 + $0x30] sm:$0xf]
          %v806 = vld [vmem:[#allocation8 + $0x34] sm:$0xf]
          %v807 = vld [vmem:[#allocation8 + $0x38] sm:$0xf]
          %v808 = vld [vmem:[#allocation8 + $0x3c] sm:$0xf]
          %v809 = vld [vmem:[%s3] sm:$0x1]
          %v811 = vlaneseq
          %v812 = vshrl.u32 %v811, 7
          %v813 = vsub.s32 0, %v812
          %v814 = vrot.slane %v809, %v813
          %v832 = vunpack.c.l.b16 %v793
          %v833 = vunpack.c.l.b16 %v794
          %v834 = vunpack.c.l.b16 %v795
          %v835 = vunpack.c.l.b16 %v796
          %v836 = vunpack.c.l.b16 %v797
          %v837 = vunpack.c.l.b16 %v798
          %v838 = vunpack.c.l.b16 %v799
          %v839 = vunpack.c.l.b16 %v800
          %v840 = vunpack.c.l.b16 %v801
          %v841 = vunpack.c.l.b16 %v802
          %v842 = vunpack.c.l.b16 %v803
          %v843 = vunpack.c.l.b16 %v804
          %v844 = vunpack.c.l.b16 %v805
          %v845 = vunpack.c.l.b16 %v806
          %v846 = vunpack.c.l.b16 %v807
          %v847 = vunpack.c.l.b16 %v808
          %v848 = vpack.c.b16 %v833, %v832
          %v849 = vpack.c.b16 %v835, %v834
          %v850 = vpack.c.b16 %v837, %v836
          %v851 = vpack.c.b16 %v839, %v838
          %v852 = vpack.c.b16 %v841, %v840
          %v853 = vpack.c.b16 %v843, %v842
          %v854 = vpack.c.b16 %v845, %v844
          %v855 = vpack.c.b16 %v847, %v846
          %864 = vmatprep.subr.bf16.mxu0 0
          %865 = vmatpush1.bf16.msra.mxu0 %v855
          %866 = vmatprep.subr.bf16.mxu0 0
          %867 = vmatpush1.bf16.msra.mxu0 %v854
          %868 = vmatprep.subr.bf16.mxu0 0
          %869 = vmatpush1.bf16.msra.mxu0 %v853
          %870 = vmatprep.subr.bf16.mxu0 0
          %871 = vmatpush1.bf16.msra.mxu0 %v852
          %872 = vmatprep.subr.bf16.mxu0 0
          %873 = vmatpush1.bf16.msra.mxu0 %v851
          %874 = vmatprep.subr.bf16.mxu0 0
          %875 = vmatpush1.bf16.msra.mxu0 %v850
          %876 = vmatprep.subr.bf16.mxu0 0
          %877 = vmatpush1.bf16.msra.mxu0 %v849
          %878 = vmatprep.subr.bf16.mxu0 0
          %879 = vmatpush1.bf16.msra.mxu0 %v848
          %880 = vmatprep.subr.bf16.mxu0 0
          %881 = vmatpush2.bf16.msra.mxu0 0
          %882 = vmatprep.subr.bf16.mxu0 0
          %883 = vmatpush2.bf16.msra.mxu0 0
          %884 = vmatprep.subr.bf16.mxu0 0
          %885 = vmatpush2.bf16.msra.mxu0 0
          %886 = vmatprep.subr.bf16.mxu0 0
          %887 = vmatpush2.bf16.msra.mxu0 0
          %888 = vmatprep.subr.bf16.mxu0 0
          %889 = vmatpush2.bf16.msra.mxu0 0
          %890 = vmatprep.subr.bf16.mxu0 0
          %891 = vmatpush2.bf16.msra.mxu0 0
          %892 = vmatprep.subr.bf16.mxu0 0
          %893 = vmatpush2.bf16.msra.mxu0 0
          %894 = vmatprep.subr.bf16.mxu0 0
          %895 = vmatpush2.bf16.msra.mxu0 0
          %896 = vmatprep.mubr.bf16.mxu0 0
          %897 = vmatmul.mubr.bf16.gmra.mxu0 %v785
          %v898 = vpop.f32.mrf.mxu0
          %v899 = vadd.f32 %v814, %v898
          %v900 = vpop.f32.mrf.mxu0
          %v901 = vpop.f32.mrf.mxu0
          %v902 = vadd.f32 %v814, %v901
          %v903 = vpop.f32.mrf.mxu0
          %904 = vmatprep.mubr.bf16.mxu0 0
          %905 = vmatmul.mubr.bf16.gmra.mxu0 %v786
          %v906 = vpop.f32.mrf.mxu0
          %v907 = vadd.f32 %v814, %v906
          %v908 = vpop.f32.mrf.mxu0
          %v909 = vpop.f32.mrf.mxu0
          %v910 = vadd.f32 %v814, %v909
          %v911 = vpop.f32.mrf.mxu0
          %912 = vmatprep.mubr.bf16.mxu0 0
          %913 = vmatmul.mubr.bf16.gmra.mxu0 %v787
          %v914 = vpop.f32.mrf.mxu0
          %v915 = vadd.f32 %v814, %v914
          %v916 = vpop.f32.mrf.mxu0
          %v917 = vpop.f32.mrf.mxu0
          %v918 = vadd.f32 %v814, %v917
          %v919 = vpop.f32.mrf.mxu0
          %920 = vmatprep.mubr.bf16.mxu0 0
          %921 = vmatmul.mubr.bf16.gmra.mxu0 %v788
          %v922 = vpop.f32.mrf.mxu0
          %v923 = vadd.f32 %v814, %v922
          %v924 = vpop.f32.mrf.mxu0
          %v925 = vpop.f32.mrf.mxu0
          %v926 = vadd.f32 %v814, %v925
          %v927 = vpop.f32.mrf.mxu0
          %928 = vmatprep.mubr.bf16.mxu0 0
          %929 = vmatmul.mubr.bf16.gmra.mxu0 %v789
          %v930 = vpop.f32.mrf.mxu0
          %v931 = vadd.f32 %v814, %v930
          %v932 = vpop.f32.mrf.mxu0
          %v933 = vpop.f32.mrf.mxu0
          %v934 = vadd.f32 %v814, %v933
          %v935 = vpop.f32.mrf.mxu0
          %936 = vmatprep.mubr.bf16.mxu0 0
          %937 = vmatmul.mubr.bf16.gmra.mxu0 %v790
          %v938 = vpop.f32.mrf.mxu0
          %v939 = vadd.f32 %v814, %v938
          %v940 = vpop.f32.mrf.mxu0
          %v941 = vpop.f32.mrf.mxu0
          %v942 = vadd.f32 %v814, %v941
          %v943 = vpop.f32.mrf.mxu0
          %944 = vmatprep.mubr.bf16.mxu0 0
          %945 = vmatmul.mubr.bf16.gmra.mxu0 %v791
          %v946 = vpop.f32.mrf.mxu0
          %v947 = vadd.f32 %v814, %v946
          %v948 = vpop.f32.mrf.mxu0
          %v949 = vpop.f32.mrf.mxu0
          %v950 = vadd.f32 %v814, %v949
          %v951 = vpop.f32.mrf.mxu0
          %952 = vmatprep.mubr.bf16.mxu0 0
          %953 = vmatmul.mubr.bf16.gmra.mxu0 %v792
          %v954 = vpop.f32.mrf.mxu0
          %v955 = vadd.f32 %v814, %v954
          %v956 = vpop.f32.mrf.mxu0
          %v957 = vpop.f32.mrf.mxu0
          %v958 = vadd.f32 %v814, %v957
          %v959 = vpop.f32.mrf.mxu0
          %960 = vdwg.mxu0
          %v961 = vmax.f32 %v899, 0.0
          %v962 = vmax.f32 %v902, 0.0
          %v963 = vmax.f32 %v907, 0.0
          %v964 = vmax.f32 %v910, 0.0
          %v965 = vmax.f32 %v915, 0.0
          %v966 = vmax.f32 %v918, 0.0
          %v967 = vmax.f32 %v923, 0.0
          %v968 = vmax.f32 %v926, 0.0
          %v969 = vmax.f32 %v931, 0.0
          %v970 = vmax.f32 %v934, 0.0
          %v971 = vmax.f32 %v939, 0.0
          %v972 = vmax.f32 %v942, 0.0
          %v973 = vmax.f32 %v947, 0.0
          %v974 = vmax.f32 %v950, 0.0
          %v975 = vmax.f32 %v955, 0.0
          %v976 = vmax.f32 %v958, 0.0
          %v977 = vpack.c.bf16 %v962, %v961
          %v978 = vpack.c.bf16 %v964, %v963
          %v979 = vpack.c.bf16 %v966, %v965
          %v980 = vpack.c.bf16 %v968, %v967
          %v981 = vpack.c.bf16 %v970, %v969
          %v982 = vpack.c.bf16 %v972, %v971
          %v983 = vpack.c.bf16 %v974, %v973
          %v984 = vpack.c.bf16 %v976, %v975
          %v985 = vld [vmem:[#allocation9] sm:$0xf]
          %v986 = vld [vmem:[#allocation9 + $0x4] sm:$0xf]
          %v987 = vld [vmem:[#allocation9 + $0x8] sm:$0xf]
          %v988 = vld [vmem:[#allocation9 + $0xc] sm:$0xf]
          %v989 = vld [vmem:[#allocation9 + $0x10] sm:$0xf]
          %v990 = vld [vmem:[#allocation9 + $0x14] sm:$0xf]
          %v991 = vld [vmem:[#allocation9 + $0x18] sm:$0xf]
          %v992 = vld [vmem:[#allocation9 + $0x1c] sm:$0xf]
          %v993 = vld [vmem:[#allocation9 + $0x20] sm:$0xf]
          %v994 = vld [vmem:[#allocation9 + $0x24] sm:$0xf]
          %v995 = vld [vmem:[#allocation9 + $0x28] sm:$0xf]
          %v996 = vld [vmem:[#allocation9 + $0x2c] sm:$0xf]
          %v997 = vld [vmem:[#allocation9 + $0x30] sm:$0xf]
          %v998 = vld [vmem:[#allocation9 + $0x34] sm:$0xf]
          %v999 = vld [vmem:[#allocation9 + $0x38] sm:$0xf]
          %v1000 = vld [vmem:[#allocation9 + $0x3c] sm:$0xf]
          %v1001 = vld [vmem:[%s5] sm:$0x1]
          %v1003 = vlaneseq
          %v1004 = vshrl.u32 %v1003, 7
          %v1005 = vsub.s32 0, %v1004
          %v1006 = vrot.slane %v1001, %v1005
          %v1024 = vunpack.c.l.b16 %v985
          %v1025 = vunpack.c.l.b16 %v986
          %v1026 = vunpack.c.l.b16 %v987
          %v1027 = vunpack.c.l.b16 %v988
          %v1028 = vunpack.c.l.b16 %v989
          %v1029 = vunpack.c.l.b16 %v990
          %v1030 = vunpack.c.l.b16 %v991
          %v1031 = vunpack.c.l.b16 %v992
          %v1032 = vunpack.c.l.b16 %v993
          %v1033 = vunpack.c.l.b16 %v994
          %v1034 = vunpack.c.l.b16 %v995
          %v1035 = vunpack.c.l.b16 %v996
          %v1036 = vunpack.c.l.b16 %v997
          %v1037 = vunpack.c.l.b16 %v998
          %v1038 = vunpack.c.l.b16 %v999
          %v1039 = vunpack.c.l.b16 %v1000
          %v1040 = vpack.c.b16 %v1025, %v1024
          %v1041 = vpack.c.b16 %v1027, %v1026
          %v1042 = vpack.c.b16 %v1029, %v1028
          %v1043 = vpack.c.b16 %v1031, %v1030
          %v1044 = vpack.c.b16 %v1033, %v1032
          %v1045 = vpack.c.b16 %v1035, %v1034
          %v1046 = vpack.c.b16 %v1037, %v1036
          %v1047 = vpack.c.b16 %v1039, %v1038
          %1056 = vmatprep.subr.bf16.mxu0 0
          %1057 = vmatpush1.bf16.msra.mxu0 %v1047
          %1058 = vmatprep.subr.bf16.mxu0 0
          %1059 = vmatpush1.bf16.msra.mxu0 %v1046
          %1060 = vmatprep.subr.bf16.mxu0 0
          %1061 = vmatpush1.bf16.msra.mxu0 %v1045
          %1062 = vmatprep.subr.bf16.mxu0 0
          %1063 = vmatpush1.bf16.msra.mxu0 %v1044
          %1064 = vmatprep.subr.bf16.mxu0 0
          %1065 = vmatpush1.bf16.msra.mxu0 %v1043
          %1066 = vmatprep.subr.bf16.mxu0 0
          %1067 = vmatpush1.bf16.msra.mxu0 %v1042
          %1068 = vmatprep.subr.bf16.mxu0 0
          %1069 = vmatpush1.bf16.msra.mxu0 %v1041
          %1070 = vmatprep.subr.bf16.mxu0 0
          %1071 = vmatpush1.bf16.msra.mxu0 %v1040
          %1072 = vmatprep.subr.bf16.mxu0 0
          %1073 = vmatpush2.bf16.msra.mxu0 0
          %1074 = vmatprep.subr.bf16.mxu0 0
          %1075 = vmatpush2.bf16.msra.mxu0 0
          %1076 = vmatprep.subr.bf16.mxu0 0
          %1077 = vmatpush2.bf16.msra.mxu0 0
          %1078 = vmatprep.subr.bf16.mxu0 0
          %1079 = vmatpush2.bf16.msra.mxu0 0
          %1080 = vmatprep.subr.bf16.mxu0 0
          %1081 = vmatpush2.bf16.msra.mxu0 0
          %1082 = vmatprep.subr.bf16.mxu0 0
          %1083 = vmatpush2.bf16.msra.mxu0 0
          %1084 = vmatprep.subr.bf16.mxu0 0
          %1085 = vmatpush2.bf16.msra.mxu0 0
          %1086 = vmatprep.subr.bf16.mxu0 0
          %1087 = vmatpush2.bf16.msra.mxu0 0
          %1088 = vmatprep.mubr.bf16.mxu0 0
          %1089 = vmatmul.mubr.bf16.gmra.mxu0 %v977
          %v1090 = vpop.f32.mrf.mxu0
          %v1091 = vadd.f32 %v1006, %v1090
          %v1092 = vpop.f32.mrf.mxu0
          %v1093 = vpop.f32.mrf.mxu0
          %v1094 = vadd.f32 %v1006, %v1093
          %v1095 = vpop.f32.mrf.mxu0
          %1096 = vmatprep.mubr.bf16.mxu0 0
          %1097 = vmatmul.mubr.bf16.gmra.mxu0 %v978
          %v1098 = vpop.f32.mrf.mxu0
          %v1099 = vadd.f32 %v1006, %v1098
          %v1100 = vpop.f32.mrf.mxu0
          %v1101 = vpop.f32.mrf.mxu0
          %v1102 = vadd.f32 %v1006, %v1101
          %v1103 = vpop.f32.mrf.mxu0
          %1104 = vmatprep.mubr.bf16.mxu0 0
          %1105 = vmatmul.mubr.bf16.gmra.mxu0 %v979
          %v1106 = vpop.f32.mrf.mxu0
          %v1107 = vadd.f32 %v1006, %v1106
          %v1108 = vpop.f32.mrf.mxu0
          %v1109 = vpop.f32.mrf.mxu0
          %v1110 = vadd.f32 %v1006, %v1109
          %v1111 = vpop.f32.mrf.mxu0
          %1112 = vmatprep.mubr.bf16.mxu0 0
          %1113 = vmatmul.mubr.bf16.gmra.mxu0 %v980
          %v1114 = vpop.f32.mrf.mxu0
          %v1115 = vadd.f32 %v1006, %v1114
          %v1116 = vpop.f32.mrf.mxu0
          %v1117 = vpop.f32.mrf.mxu0
          %v1118 = vadd.f32 %v1006, %v1117
          %v1119 = vpop.f32.mrf.mxu0
          %1120 = vmatprep.mubr.bf16.mxu0 0
          %1121 = vmatmul.mubr.bf16.gmra.mxu0 %v981
          %v1122 = vpop.f32.mrf.mxu0
          %v1123 = vadd.f32 %v1006, %v1122
          %v1124 = vpop.f32.mrf.mxu0
          %v1125 = vpop.f32.mrf.mxu0
          %v1126 = vadd.f32 %v1006, %v1125
          %v1127 = vpop.f32.mrf.mxu0
          %1128 = vmatprep.mubr.bf16.mxu0 0
          %1129 = vmatmul.mubr.bf16.gmra.mxu0 %v982
          %v1130 = vpop.f32.mrf.mxu0
          %v1131 = vadd.f32 %v1006, %v1130
          %v1132 = vpop.f32.mrf.mxu0
          %v1133 = vpop.f32.mrf.mxu0
          %v1134 = vadd.f32 %v1006, %v1133
          %v1135 = vpop.f32.mrf.mxu0
          %1136 = vmatprep.mubr.bf16.mxu0 0
          %1137 = vmatmul.mubr.bf16.gmra.mxu0 %v983
          %v1138 = vpop.f32.mrf.mxu0
          %v1139 = vadd.f32 %v1006, %v1138
          %v1140 = vpop.f32.mrf.mxu0
          %v1141 = vpop.f32.mrf.mxu0
          %v1142 = vadd.f32 %v1006, %v1141
          %v1143 = vpop.f32.mrf.mxu0
          %1144 = vmatprep.mubr.bf16.mxu0 0
          %1145 = vmatmul.mubr.bf16.gmra.mxu0 %v984
          %v1146 = vpop.f32.mrf.mxu0
          %v1147 = vadd.f32 %v1006, %v1146
          %v1148 = vpop.f32.mrf.mxu0
          %v1149 = vpop.f32.mrf.mxu0
          %v1150 = vadd.f32 %v1006, %v1149
          %v1151 = vpop.f32.mrf.mxu0
          %1152 = vdwg.mxu0
          %v1153 = vmax.f32 %v1091, 0.0
          %v1154 = vmax.f32 %v1094, 0.0
          %v1155 = vmax.f32 %v1099, 0.0
          %v1156 = vmax.f32 %v1102, 0.0
          %v1157 = vmax.f32 %v1107, 0.0
          %v1158 = vmax.f32 %v1110, 0.0
          %v1159 = vmax.f32 %v1115, 0.0
          %v1160 = vmax.f32 %v1118, 0.0
          %v1161 = vmax.f32 %v1123, 0.0
          %v1162 = vmax.f32 %v1126, 0.0
          %v1163 = vmax.f32 %v1131, 0.0
          %v1164 = vmax.f32 %v1134, 0.0
          %v1165 = vmax.f32 %v1139, 0.0
          %v1166 = vmax.f32 %v1142, 0.0
          %v1167 = vmax.f32 %v1147, 0.0
          %v1168 = vmax.f32 %v1150, 0.0
          %v1169 = vpack.c.bf16 %v1154, %v1153
          %v1170 = vpack.c.bf16 %v1156, %v1155
          %v1171 = vpack.c.bf16 %v1158, %v1157
          %v1172 = vpack.c.bf16 %v1160, %v1159
          %v1173 = vpack.c.bf16 %v1162, %v1161
          %v1174 = vpack.c.bf16 %v1164, %v1163
          %v1175 = vpack.c.bf16 %v1166, %v1165
          %v1176 = vpack.c.bf16 %v1168, %v1167
          %v1185 = vunpack.c.l.b16 %v1169
          %v1186 = vunpack.c.h.b16 %v1169
          %v1187 = vunpack.c.l.b16 %v1170
          %v1188 = vunpack.c.h.b16 %v1170
          %v1189 = vunpack.c.l.b16 %v1171
          %v1190 = vunpack.c.h.b16 %v1171
          %v1191 = vunpack.c.l.b16 %v1172
          %v1192 = vunpack.c.h.b16 %v1172
          %v1193 = vunpack.c.l.b16 %v1173
          %v1194 = vunpack.c.h.b16 %v1173
          %v1195 = vunpack.c.l.b16 %v1174
          %v1196 = vunpack.c.h.b16 %v1174
          %v1197 = vunpack.c.l.b16 %v1175
          %v1198 = vunpack.c.h.b16 %v1175
          %v1199 = vunpack.c.l.b16 %v1176
          %v1200 = vunpack.c.h.b16 %v1176
          %v1201 = vpack.c.b16 %v1185, %v1185
          %v1202 = vpack.c.b16 %v1186, %v1186
          %v1203 = vpack.c.b16 %v1187, %v1187
          %v1204 = vpack.c.b16 %v1188, %v1188
          %v1205 = vpack.c.b16 %v1189, %v1189
          %v1206 = vpack.c.b16 %v1190, %v1190
          %v1207 = vpack.c.b16 %v1191, %v1191
          %v1208 = vpack.c.b16 %v1192, %v1192
          %v1209 = vpack.c.b16 %v1193, %v1193
          %v1210 = vpack.c.b16 %v1194, %v1194
          %v1211 = vpack.c.b16 %v1195, %v1195
          %v1212 = vpack.c.b16 %v1196, %v1196
          %v1213 = vpack.c.b16 %v1197, %v1197
          %v1214 = vpack.c.b16 %v1198, %v1198
          %v1215 = vpack.c.b16 %v1199, %v1199
          %v1216 = vpack.c.b16 %v1200, %v1200
          %1233 = vst [vmem:[%s330] sm:$0xf] %v1201
          %1234 = vst [vmem:[%s330 + $0x4] sm:$0xf] %v1202
          %1235 = vst [vmem:[%s330 + $0x8] sm:$0xf] %v1203
          %1236 = vst [vmem:[%s330 + $0xc] sm:$0xf] %v1204
          %1237 = vst [vmem:[%s330 + $0x10] sm:$0xf] %v1205
          %1238 = vst [vmem:[%s330 + $0x14] sm:$0xf] %v1206
          %1239 = vst [vmem:[%s330 + $0x18] sm:$0xf] %v1207
          %1240 = vst [vmem:[%s330 + $0x1c] sm:$0xf] %v1208
          %1241 = vst [vmem:[%s330 + $0x20] sm:$0xf] %v1209
          %1242 = vst [vmem:[%s330 + $0x24] sm:$0xf] %v1210
          %1243 = vst [vmem:[%s330 + $0x28] sm:$0xf] %v1211
          %1244 = vst [vmem:[%s330 + $0x2c] sm:$0xf] %v1212
          %1245 = vst [vmem:[%s330 + $0x30] sm:$0xf] %v1213
          %1246 = vst [vmem:[%s330 + $0x34] sm:$0xf] %v1214
          %1247 = vst [vmem:[%s330 + $0x38] sm:$0xf] %v1215
          %1248 = vst [vmem:[%s330 + $0x3c] sm:$0xf] %v1216
        $region68: #{tpu_custom_call.1} parent=43 // pred_fallthru
          _
        %s1249 = sand.u32 %s178, 1
        %s1250 = scalar_lea.sflag [#allocation5], %s1249
        %s1251 = sand.u32 %s178, 1
        %s1252 = smul.addr %s1251, 64
        %s1253 = scalar_lea.vmem [#allocation11], %s1252
        // Predicated region
        $region69: #{tpu_custom_call.1} parent=43 // pred_check
          %p1254 = pneg %p188
        $region70: #{tpu_custom_call.1} parent=43 // pred_check_branch
          %1256 = sbr.rel (%p1254) target = $region72
        $region71: #{tpu_custom_call.1} parent=43 // pred_region
          %s1257 = smul.u32 16, %s29
          %s1259 = ssub.s32 1024, 1024
          %1260 = vsyncadd %s1250, %s1259
          %s1261 = smul.addr %s1257, 64
          %s1262 = scalar_lea.hbm %s6, %s1261
          %s1263 = sshll.u32 %s1253, 4
          %s1264 = int_to_ptr.vmem [resolvable:$true] %s1263
          %1269 = dma.vmem_to_hbm [thread:$0]  %s1264, 1024, %s1262, %s1250, 64, 64, 4
        $region72: #{tpu_custom_call.1} parent=43 // pred_fallthru
          _
      $region44: #{tpu_custom_call.1} parent=5 // pred_fallthru
        _
      %p1270 = scmp.le.s32.totalorder 2, %s20
      // Predicated region
      $region73: #{tpu_custom_call.1} parent=5 // pred_check
        %p1271 = pneg %p1270
      $region74: #{tpu_custom_call.1} parent=5 // pred_check_branch
        %1273 = sbr.rel (%p1271) target = $region76
      $region75: #{tpu_custom_call.1} parent=5 // pred_region
        %s1274 = ssub.s32 %s20, 2
        // Predicated region
        $region77: #{tpu_custom_call.1} parent=75 // pred_check
          %p1275 = pneg %p194
        $region78: #{tpu_custom_call.1} parent=75 // pred_check_branch
          %1277 = sbr.rel (%p1275) target = $region80
        $region79: #{tpu_custom_call.1} parent=75 // pred_region
          %s1278 = sand.u32 %s179, 1
          %s1279 = scalar_lea.sflag [#allocation5], %s1278
          %s1280 = sand.u32 %s179, 1
          %s1281 = smul.addr %s1280, 64
          %s1282 = scalar_lea.vmem [#allocation11], %s1281
          %1283 = dma.done %s1279, 1024
        $region80: #{tpu_custom_call.1} parent=75 // pred_fallthru
          _
      $region76: #{tpu_custom_call.1} parent=5 // pred_fallthru
        _
    $region6: #{tpu_custom_call.1} parent=1 // loop_footer
      %s24 = sadd.s32 1, %s20
    $region7: #{tpu_custom_call.1} parent=1 // loop_footer_branch
      %19 = sbr.rel target = $region3
    $region8: #{tpu_custom_call.1} parent=1 // loop_exit
      _
    %1284 = vsyncpa [#allocation4], 1
    %s1285 = scalar_lea.sflag [#allocation4], 1
    %1286 = vsyncpa %s1285, 1
    %1287 = vsyncpa [#allocation7], 1
    %1288 = vsyncpa [#allocation10], 1
    %1289 = vsyncpa [#allocation5], 1
    %s1290 = scalar_lea.sflag [#allocation5], 1
    %1291 = vsyncpa %s1290, 1

</llo_original>
